<compile_context>
chip_gen: v5e
topology: v5e:2x2
jax: 0.10.0
libtpu: 0.0.40
codegen_flags: <defaults>
</compile_context>

<pallas_src>
import functools

import jax
import jax.numpy as jnp
from jax.experimental import pallas as pl
from jax.experimental.pallas import tpu as pltpu


# ----------------------------- hyper-parameters ------------------------------
LABEL_SMOOTHING = 0.1
T1 = 0.2
T2 = 1.2
NUM_ITERS = 5
REDUCTION = "mean"


# ------------------------------ math helpers ---------------------------------
def _fast_recip(x):
    # EUP approximate reciprocal + one Newton-Raphson refinement.
    # base >= 1 structurally in this kernel (activations are shifted by their
    # per-example max and z >= 1), so there is no 1/0 path and the refined
    # relative error (~1e-7) stays tiny even after raising to the 9th power.
    r = pl.reciprocal(x, approx=True)
    return r * (2.0 - x * r)


def _log_t(u, t):
    # reference-only helper (t != 1.0 for t1=0.2 / t2=1.2)
    return (jnp.power(u, 1.0 - t) - 1.0) / (1.0 - t)


def _exp_t(u, t):
    # reference-only helper
    return jnp.power(jnp.maximum(1.0 + (1.0 - t) * u, 0.0), 1.0 / (1.0 - t))


# --------------------------------- kernel ------------------------------------
def _btl_loss_kernel(logits_ref, targets_ref, balance_ref, out_ref):
    x = logits_ref[...].astype(jnp.float32)      # (C, TN)  classes on sublanes
    tgt = targets_ref[...]                       # (1, TN)  int32 (-1 on pads)
    bal = balance_ref[...].astype(jnp.float32)   # (C, 1)   per-class weights

    c, tn = x.shape

    one_minus_t2 = 1.0 - T2          # -0.2   (exp_t(u, t2) = base**(-5))

    # ---- tempered-softmax normalizer (t2 = 1.2), fixed-point iteration ------
    mu = jnp.max(x, axis=0, keepdims=True)                   # (1, TN)
    a0 = x - mu                                              # <= 0 -> base >= 1
    a = a0
    for _ in range(NUM_ITERS):
        base = jnp.maximum(1.0 + one_minus_t2 * a, 0.0)
        r = _fast_recip(base)
        r2 = r * r
        z = jnp.sum(r2 * r2 * r, axis=0, keepdims=True)      # sum_c exp_t(a, t2)
        a = a0 * jnp.power(z, one_minus_t2)                  # (1, TN) pow only
    base = jnp.maximum(1.0 + one_minus_t2 * a, 0.0)
    r = _fast_recip(base)
    r2 = r * r
    z = jnp.sum(r2 * r2 * r, axis=0, keepdims=True)          # (1, TN)

    # probs = exp_t(x - norm_const, t2), norm_const = 5*(z**0.2 - 1) + mu
    #   => base_p = z**0.2 + (1 - t2) * a0      (norm_const folded away)
    # probs**(1-t1) = rp**4 ; probs**(2-t1) = rp**9
    z02 = jnp.power(z, -one_minus_t2)                        # z**0.2, (1, TN)
    base_p = jnp.maximum(z02 + one_minus_t2 * a0, 0.0)       # (C, TN)
    rp = _fast_recip(base_p)
    rp2 = rp * rp
    rp4 = rp2 * rp2
    rp9 = rp4 * rp4 * rp

    # ---- constant-folded smoothed-target terms (targets_s in {on, off}) -----
    ls, t1 = LABEL_SMOOTHING, T1
    on_val = (1.0 - (c / (c - 1.0)) * ls) + ls / (c - 1.0)
    off_val = ls / (c - 1.0)
    inv_1mt1 = 1.0 / (1.0 - t1)
    inv_2mt1 = 1.0 / (2.0 - t1)
    logt_on = ((on_val + 1e-10) ** (1.0 - t1) - 1.0) * inv_1mt1
    logt_off = ((off_val + 1e-10) ** (1.0 - t1) - 1.0) * inv_1mt1
    # const_term = log_t(targets_s+1e-10, t1)*targets_s - targets_s**(2-t1)/(2-t1)
    c_on = logt_on * on_val - (on_val ** (2.0 - t1)) * inv_2mt1
    c_off = logt_off * off_val - (off_val ** (2.0 - t1)) * inv_2mt1
    const_sum = c_on + (c - 1.0) * c_off       # sum_c const_term (per example)

    cls_ids = jax.lax.broadcasted_iota(jnp.int32, (c, tn), 0)
    is_on = cls_ids == tgt                                   # (C, TN)

    # sum_c(log_t(probs)*targets_s) = off*sum_c(logt) + (on-off)*logt[target]
    logt_probs = (rp4 - 1.0) * inv_1mt1                      # log_t(probs, t1)
    sum_logt = jnp.sum(logt_probs, axis=0, keepdims=True)               # (1, TN)
    sum_logt_on = jnp.sum(jnp.where(is_on, logt_probs, 0.0),
                          axis=0, keepdims=True)                        # (1, TN)
    sum_rp9 = jnp.sum(rp9, axis=0, keepdims=True)                       # (1, TN)

    # per-example balance weight gathered in-kernel (exactly 0 on padded cols,
    # since their target is -1 and matches no class id)
    w = jnp.sum(jnp.where(is_on, bal, 0.0), axis=0, keepdims=True)      # (1, TN)

    per_example = (const_sum
                   - off_val * sum_logt
                   - (on_val - off_val) * sum_logt_on
                   + inv_2mt1 * sum_rp9)                                # (1, TN)

    out_ref[0] = jnp.sum(per_example * w, axis=1, keepdims=True)        # (1, 1)


# -------------------------------- wrapper ------------------------------------
@functools.partial(jax.jit, static_argnames=("block_cols",))
def weighted_bi_tempered_logistic_loss(logits, targets, balance, *, block_cols=4096):
    """logits: (N, C) float32/bf16; targets: (N,) int; balance: (C,) float32."""
    n, c = logits.shape
    targets = targets.astype(jnp.int32)
    balance_2d = jnp.asarray(balance, dtype=jnp.float32).reshape(c, 1)

    # ---- column-tile sizing: multiple of 128 lanes ---------------------------
    # TN = 4096 -> 256 KiB f32 logits tile; with 2x input buffering plus ~15
    # (C, TN) f32 temporaries the working set stays ~4 MiB: comfortably inside
    # scoped VMEM on v5e (16 MiB), v6e (32 MiB) and v7x (32 MiB default / 64 MiB
    # physical).  The min() with ~N/2 keeps num_tiles >= 2 whenever N allows,
    # so the "parallel" grid axis can feed both v7x TensorCores.
    tn = max(128, min(block_cols, ((n + 255) // 256) * 128))
    num_tiles = -(-n // tn)            # cdiv
    n_pad = num_tiles * tn
    pad = n_pad - n

    # Transpose to (C, N): classes on sublanes, examples on lanes.  Padding to
    # a whole number of column tiles is folded into this (mandatory) transpose
    # pass, so there is no extra full-HBM jnp.pad rewrite of the logits.
    logits_t = jnp.transpose(logits)
    if pad:
        logits_t = jnp.pad(logits_t, ((0, 0), (0, pad)))
        targets = jnp.pad(targets, ((0, pad),), constant_values=-1)  # -> w == 0
    targets_2d = targets.reshape(1, n_pad)

    partials = pl.pallas_call(
        _btl_loss_kernel,
        out_shape=jax.ShapeDtypeStruct((num_tiles, 1, 1), jnp.float32),
        grid_spec=pltpu.PrefetchScalarGridSpec(
            num_scalar_prefetch=0,
            grid=(num_tiles,),
            in_specs=[
                pl.BlockSpec((c, tn), lambda i: (0, i)),   # logits (C, TN)
                pl.BlockSpec((1, tn), lambda i: (0, i)),   # targets (1, TN)
                pl.BlockSpec((c, 1), lambda i: (0, 0)),    # balance, resident
            ],
            out_specs=pl.BlockSpec((1, 1, 1), lambda i: (i, 0, 0)),
        ),
        compiler_params=pltpu.CompilerParams(
            dimension_semantics=("parallel",),
        ),
    )(logits_t, targets_2d, balance_2d)

    total = jnp.sum(partials)
    if REDUCTION == "mean":
        total = total / n
    return total


# ------------------------- pure-JAX reference (check) -------------------------
def _reference(logits, targets, balance):
    n, c = logits.shape
    logits = logits.astype(jnp.float32)
    onehot = jax.nn.one_hot(targets, c, dtype=jnp.float32)
    balance_mask = balance[targets]
    ls = LABEL_SMOOTHING
    targets_s = (1.0 - (c / (c - 1)) * ls) * onehot + ls / (c - 1)

    mu = jnp.max(logits, axis=-1, keepdims=True)
    a0 = logits - mu
    a = a0
    for _ in range(NUM_ITERS):
        z = jnp.sum(_exp_t(a, T2), axis=-1, keepdims=True)
        a = a0 * jnp.power(z, 1.0 - T2)
    z = jnp.sum(_exp_t(a, T2), axis=-1, keepdims=True)
    norm_const = -_log_t(1.0 / z, T2) + mu
    probs = _exp_t(logits - norm_const, T2)

    temp1 = (_log_t(targets_s + 1e-10, T1) - _log_t(probs, T1)) * targets_s
    temp2 = (1.0 / (2.0 - T1)) * (
        jnp.power(targets_s, 2.0 - T1) - jnp.power(probs, 2.0 - T1)
    )
    loss_values = temp1 - temp2
    per_example = jnp.sum(loss_values, axis=-1) * balance_mask
    return jnp.mean(per_example)


# ----------------------------------- main -------------------------------------
if __name__ == "__main__":
    N, C = 8, 16  # batch, num_classes

    key = jax.random.PRNGKey(0)
    k_logit, k_tgt = jax.random.split(key)

    logits = jax.random.normal(k_logit, (N, C), dtype=jnp.float32)
    targets = jax.random.randint(k_tgt, (N,), 0, C, dtype=jnp.int32)
    # deterministic per-class balance weights (len(balance) == num_classes)
    balance = jnp.asarray([float(i % 4 + 1) for i in range(C)], dtype=jnp.float32)

    loss = weighted_bi_tempered_logistic_loss(logits, targets, balance)
    loss = jax.block_until_ready(loss)

    ref = _reference(logits, targets, balance)
    assert jnp.allclose(loss, ref, rtol=1e-4, atol=1e-4), (loss, ref)

    print("KERNEL_OK")
</pallas_src>

<mosaic_0001>
module attributes {stable_mosaic.version = 11 : i64} {
  func.func @_btl_loss_kernel(%arg0: i32, %arg1: memref<16x128xf32, #tpu.memory_space<vmem>>, %arg2: memref<1x128xi32, #tpu.memory_space<vmem>>, %arg3: memref<16x1xf32, #tpu.memory_space<vmem>>, %arg4: memref<1x1x1xf32, #tpu.memory_space<vmem>>) attributes {dimension_semantics = [#tpu.dimension_semantics<parallel>], iteration_bounds = array<i64: 1>, scalar_prefetch = 0 : i64, scratch_operands = 0 : i64, tpu.core_type = #tpu.core_type<tc>, window_params = [{transform_indices = @transform_0, window_bounds = array<i64: 16, 128>}, {transform_indices = @transform_1, window_bounds = array<i64: 1, 128>}, {pipeline_mode = #tpu.pipeline_mode<synchronous>, transform_indices = @transform_2, window_bounds = array<i64: 16, 1>}, {transform_indices = @transform_3, window_bounds = array<i64: 1, 1, 1>}]} {
    %c0 = arith.constant 0 : index
    %c0_0 = arith.constant 0 : index
    %0 = vector.load %arg1[%c0, %c0_0] : memref<16x128xf32, #tpu.memory_space<vmem>>, vector<16x128xf32>
    %c0_1 = arith.constant 0 : index
    %c0_2 = arith.constant 0 : index
    %1 = vector.load %arg2[%c0_1, %c0_2] : memref<1x128xi32, #tpu.memory_space<vmem>>, vector<1x128xi32>
    %c0_3 = arith.constant 0 : index
    %c0_4 = arith.constant 0 : index
    %2 = vector.load %arg3[%c0_3, %c0_4] : memref<16x1xf32, #tpu.memory_space<vmem>>, vector<16x1xf32>
    %cst = arith.constant dense<0xFF800000> : vector<128xf32>
    %3 = vector.multi_reduction <maximumf>, %0, %cst [0] : vector<16x128xf32> to vector<128xf32>
    %4 = vector.shape_cast %3 : vector<128xf32> to vector<1x128xf32>
    %5 = vector.broadcast %4 : vector<1x128xf32> to vector<16x128xf32>
    %6 = arith.subf %0, %5 : vector<16x128xf32>
    %cst_5 = arith.constant -2.000000e-01 : f32
    %7 = vector.broadcast %cst_5 : f32 to vector<16x128xf32>
    %8 = arith.mulf %7, %6 : vector<16x128xf32>
    %cst_6 = arith.constant 1.000000e+00 : f32
    %9 = vector.broadcast %cst_6 : f32 to vector<16x128xf32>
    %10 = arith.addf %9, %8 : vector<16x128xf32>
    %cst_7 = arith.constant 0.000000e+00 : f32
    %11 = vector.broadcast %cst_7 : f32 to vector<16x128xf32>
    %12 = arith.maximumf %10, %11 : vector<16x128xf32>
    %13 = tpu.reciprocal %12 {approx = true} : vector<16x128xf32> -> vector<16x128xf32>
    %14 = arith.mulf %12, %13 : vector<16x128xf32>
    %cst_8 = arith.constant 2.000000e+00 : f32
    %15 = vector.broadcast %cst_8 : f32 to vector<16x128xf32>
    %16 = arith.subf %15, %14 : vector<16x128xf32>
    %17 = arith.mulf %13, %16 : vector<16x128xf32>
    %18 = arith.mulf %17, %17 : vector<16x128xf32>
    %19 = arith.mulf %18, %18 : vector<16x128xf32>
    %20 = arith.mulf %19, %17 : vector<16x128xf32>
    %cst_9 = arith.constant dense<0.000000e+00> : vector<128xf32>
    %21 = vector.multi_reduction <add>, %20, %cst_9 [0] : vector<16x128xf32> to vector<128xf32>
    %22 = vector.shape_cast %21 : vector<128xf32> to vector<1x128xf32>
    %cst_10 = arith.constant -2.000000e-01 : f32
    %23 = vector.broadcast %cst_10 : f32 to vector<1x128xf32>
    %24 = math.powf %22, %23 : vector<1x128xf32>
    %25 = vector.broadcast %24 : vector<1x128xf32> to vector<16x128xf32>
    %26 = arith.mulf %6, %25 : vector<16x128xf32>
    %cst_11 = arith.constant -2.000000e-01 : f32
    %27 = vector.broadcast %cst_11 : f32 to vector<16x128xf32>
    %28 = arith.mulf %27, %26 : vector<16x128xf32>
    %cst_12 = arith.constant 1.000000e+00 : f32
    %29 = vector.broadcast %cst_12 : f32 to vector<16x128xf32>
    %30 = arith.addf %29, %28 : vector<16x128xf32>
    %cst_13 = arith.constant 0.000000e+00 : f32
    %31 = vector.broadcast %cst_13 : f32 to vector<16x128xf32>
    %32 = arith.maximumf %30, %31 : vector<16x128xf32>
    %33 = tpu.reciprocal %32 {approx = true} : vector<16x128xf32> -> vector<16x128xf32>
    %34 = arith.mulf %32, %33 : vector<16x128xf32>
    %cst_14 = arith.constant 2.000000e+00 : f32
    %35 = vector.broadcast %cst_14 : f32 to vector<16x128xf32>
    %36 = arith.subf %35, %34 : vector<16x128xf32>
    %37 = arith.mulf %33, %36 : vector<16x128xf32>
    %38 = arith.mulf %37, %37 : vector<16x128xf32>
    %39 = arith.mulf %38, %38 : vector<16x128xf32>
    %40 = arith.mulf %39, %37 : vector<16x128xf32>
    %cst_15 = arith.constant dense<0.000000e+00> : vector<128xf32>
    %41 = vector.multi_reduction <add>, %40, %cst_15 [0] : vector<16x128xf32> to vector<128xf32>
    %42 = vector.shape_cast %41 : vector<128xf32> to vector<1x128xf32>
    %cst_16 = arith.constant -2.000000e-01 : f32
    %43 = vector.broadcast %cst_16 : f32 to vector<1x128xf32>
    %44 = math.powf %42, %43 : vector<1x128xf32>
    %45 = vector.broadcast %44 : vector<1x128xf32> to vector<16x128xf32>
    %46 = arith.mulf %6, %45 : vector<16x128xf32>
    %cst_17 = arith.constant -2.000000e-01 : f32
    %47 = vector.broadcast %cst_17 : f32 to vector<16x128xf32>
    %48 = arith.mulf %47, %46 : vector<16x128xf32>
    %cst_18 = arith.constant 1.000000e+00 : f32
    %49 = vector.broadcast %cst_18 : f32 to vector<16x128xf32>
    %50 = arith.addf %49, %48 : vector<16x128xf32>
    %cst_19 = arith.constant 0.000000e+00 : f32
    %51 = vector.broadcast %cst_19 : f32 to vector<16x128xf32>
    %52 = arith.maximumf %50, %51 : vector<16x128xf32>
    %53 = tpu.reciprocal %52 {approx = true} : vector<16x128xf32> -> vector<16x128xf32>
    %54 = arith.mulf %52, %53 : vector<16x128xf32>
    %cst_20 = arith.constant 2.000000e+00 : f32
    %55 = vector.broadcast %cst_20 : f32 to vector<16x128xf32>
    %56 = arith.subf %55, %54 : vector<16x128xf32>
    %57 = arith.mulf %53, %56 : vector<16x128xf32>
    %58 = arith.mulf %57, %57 : vector<16x128xf32>
    %59 = arith.mulf %58, %58 : vector<16x128xf32>
    %60 = arith.mulf %59, %57 : vector<16x128xf32>
    %cst_21 = arith.constant dense<0.000000e+00> : vector<128xf32>
    %61 = vector.multi_reduction <add>, %60, %cst_21 [0] : vector<16x128xf32> to vector<128xf32>
    %62 = vector.shape_cast %61 : vector<128xf32> to vector<1x128xf32>
    %cst_22 = arith.constant -2.000000e-01 : f32
    %63 = vector.broadcast %cst_22 : f32 to vector<1x128xf32>
    %64 = math.powf %62, %63 : vector<1x128xf32>
    %65 = vector.broadcast %64 : vector<1x128xf32> to vector<16x128xf32>
    %66 = arith.mulf %6, %65 : vector<16x128xf32>
    %cst_23 = arith.constant -2.000000e-01 : f32
    %67 = vector.broadcast %cst_23 : f32 to vector<16x128xf32>
    %68 = arith.mulf %67, %66 : vector<16x128xf32>
    %cst_24 = arith.constant 1.000000e+00 : f32
    %69 = vector.broadcast %cst_24 : f32 to vector<16x128xf32>
    %70 = arith.addf %69, %68 : vector<16x128xf32>
    %cst_25 = arith.constant 0.000000e+00 : f32
    %71 = vector.broadcast %cst_25 : f32 to vector<16x128xf32>
    %72 = arith.maximumf %70, %71 : vector<16x128xf32>
    %73 = tpu.reciprocal %72 {approx = true} : vector<16x128xf32> -> vector<16x128xf32>
    %74 = arith.mulf %72, %73 : vector<16x128xf32>
    %cst_26 = arith.constant 2.000000e+00 : f32
    %75 = vector.broadcast %cst_26 : f32 to vector<16x128xf32>
    %76 = arith.subf %75, %74 : vector<16x128xf32>
    %77 = arith.mulf %73, %76 : vector<16x128xf32>
    %78 = arith.mulf %77, %77 : vector<16x128xf32>
    %79 = arith.mulf %78, %78 : vector<16x128xf32>
    %80 = arith.mulf %79, %77 : vector<16x128xf32>
    %cst_27 = arith.constant dense<0.000000e+00> : vector<128xf32>
    %81 = vector.multi_reduction <add>, %80, %cst_27 [0] : vector<16x128xf32> to vector<128xf32>
    %82 = vector.shape_cast %81 : vector<128xf32> to vector<1x128xf32>
    %cst_28 = arith.constant -2.000000e-01 : f32
    %83 = vector.broadcast %cst_28 : f32 to vector<1x128xf32>
    %84 = math.powf %82, %83 : vector<1x128xf32>
    %85 = vector.broadcast %84 : vector<1x128xf32> to vector<16x128xf32>
    %86 = arith.mulf %6, %85 : vector<16x128xf32>
    %cst_29 = arith.constant -2.000000e-01 : f32
    %87 = vector.broadcast %cst_29 : f32 to vector<16x128xf32>
    %88 = arith.mulf %87, %86 : vector<16x128xf32>
    %cst_30 = arith.constant 1.000000e+00 : f32
    %89 = vector.broadcast %cst_30 : f32 to vector<16x128xf32>
    %90 = arith.addf %89, %88 : vector<16x128xf32>
    %cst_31 = arith.constant 0.000000e+00 : f32
    %91 = vector.broadcast %cst_31 : f32 to vector<16x128xf32>
    %92 = arith.maximumf %90, %91 : vector<16x128xf32>
    %93 = tpu.reciprocal %92 {approx = true} : vector<16x128xf32> -> vector<16x128xf32>
    %94 = arith.mulf %92, %93 : vector<16x128xf32>
    %cst_32 = arith.constant 2.000000e+00 : f32
    %95 = vector.broadcast %cst_32 : f32 to vector<16x128xf32>
    %96 = arith.subf %95, %94 : vector<16x128xf32>
    %97 = arith.mulf %93, %96 : vector<16x128xf32>
    %98 = arith.mulf %97, %97 : vector<16x128xf32>
    %99 = arith.mulf %98, %98 : vector<16x128xf32>
    %100 = arith.mulf %99, %97 : vector<16x128xf32>
    %cst_33 = arith.constant dense<0.000000e+00> : vector<128xf32>
    %101 = vector.multi_reduction <add>, %100, %cst_33 [0] : vector<16x128xf32> to vector<128xf32>
    %102 = vector.shape_cast %101 : vector<128xf32> to vector<1x128xf32>
    %cst_34 = arith.constant -2.000000e-01 : f32
    %103 = vector.broadcast %cst_34 : f32 to vector<1x128xf32>
    %104 = math.powf %102, %103 : vector<1x128xf32>
    %105 = vector.broadcast %104 : vector<1x128xf32> to vector<16x128xf32>
    %106 = arith.mulf %6, %105 : vector<16x128xf32>
    %cst_35 = arith.constant -2.000000e-01 : f32
    %107 = vector.broadcast %cst_35 : f32 to vector<16x128xf32>
    %108 = arith.mulf %107, %106 : vector<16x128xf32>
    %cst_36 = arith.constant 1.000000e+00 : f32
    %109 = vector.broadcast %cst_36 : f32 to vector<16x128xf32>
    %110 = arith.addf %109, %108 : vector<16x128xf32>
    %cst_37 = arith.constant 0.000000e+00 : f32
    %111 = vector.broadcast %cst_37 : f32 to vector<16x128xf32>
    %112 = arith.maximumf %110, %111 : vector<16x128xf32>
    %113 = tpu.reciprocal %112 {approx = true} : vector<16x128xf32> -> vector<16x128xf32>
    %114 = arith.mulf %112, %113 : vector<16x128xf32>
    %cst_38 = arith.constant 2.000000e+00 : f32
    %115 = vector.broadcast %cst_38 : f32 to vector<16x128xf32>
    %116 = arith.subf %115, %114 : vector<16x128xf32>
    %117 = arith.mulf %113, %116 : vector<16x128xf32>
    %118 = arith.mulf %117, %117 : vector<16x128xf32>
    %119 = arith.mulf %118, %118 : vector<16x128xf32>
    %120 = arith.mulf %119, %117 : vector<16x128xf32>
    %cst_39 = arith.constant dense<0.000000e+00> : vector<128xf32>
    %121 = vector.multi_reduction <add>, %120, %cst_39 [0] : vector<16x128xf32> to vector<128xf32>
    %122 = vector.shape_cast %121 : vector<128xf32> to vector<1x128xf32>
    %cst_40 = arith.constant 2.000000e-01 : f32
    %123 = vector.broadcast %cst_40 : f32 to vector<1x128xf32>
    %124 = math.powf %122, %123 : vector<1x128xf32>
    %cst_41 = arith.constant -2.000000e-01 : f32
    %125 = vector.broadcast %cst_41 : f32 to vector<16x128xf32>
    %126 = arith.mulf %125, %6 : vector<16x128xf32>
    %127 = vector.broadcast %124 : vector<1x128xf32> to vector<16x128xf32>
    %128 = arith.addf %127, %126 : vector<16x128xf32>
    %cst_42 = arith.constant 0.000000e+00 : f32
    %129 = vector.broadcast %cst_42 : f32 to vector<16x128xf32>
    %130 = arith.maximumf %128, %129 : vector<16x128xf32>
    %131 = tpu.reciprocal %130 {approx = true} : vector<16x128xf32> -> vector<16x128xf32>
    %132 = arith.mulf %130, %131 : vector<16x128xf32>
    %cst_43 = arith.constant 2.000000e+00 : f32
    %133 = vector.broadcast %cst_43 : f32 to vector<16x128xf32>
    %134 = arith.subf %133, %132 : vector<16x128xf32>
    %135 = arith.mulf %131, %134 : vector<16x128xf32>
    %136 = arith.mulf %135, %135 : vector<16x128xf32>
    %137 = arith.mulf %136, %136 : vector<16x128xf32>
    %138 = arith.mulf %137, %137 : vector<16x128xf32>
    %139 = arith.mulf %138, %135 : vector<16x128xf32>
    %140 = tpu.iota {dimensions = array<i32: 0>} : vector<16x128xi32>
    %141 = vector.broadcast %1 : vector<1x128xi32> to vector<16x128xi32>
    %142 = arith.cmpi eq, %140, %141 : vector<16x128xi32>
    %cst_44 = arith.constant 1.000000e+00 : f32
    %143 = vector.broadcast %cst_44 : f32 to vector<16x128xf32>
    %144 = arith.subf %137, %143 : vector<16x128xf32>
    %cst_45 = arith.constant 1.250000e+00 : f32
    %145 = vector.broadcast %cst_45 : f32 to vector<16x128xf32>
    %146 = arith.mulf %144, %145 : vector<16x128xf32>
    %cst_46 = arith.constant dense<0.000000e+00> : vector<128xf32>
    %147 = vector.multi_reduction <add>, %146, %cst_46 [0] : vector<16x128xf32> to vector<128xf32>
    %148 = vector.shape_cast %147 : vector<128xf32> to vector<1x128xf32>
    %cst_47 = arith.constant 0.000000e+00 : f32
    %149 = vector.broadcast %cst_47 : f32 to vector<16x128xf32>
    %150 = arith.select %142, %146, %149 : vector<16x128xi1>, vector<16x128xf32>
    %cst_48 = arith.constant dense<0.000000e+00> : vector<128xf32>
    %151 = vector.multi_reduction <add>, %150, %cst_48 [0] : vector<16x128xf32> to vector<128xf32>
    %152 = vector.shape_cast %151 : vector<128xf32> to vector<1x128xf32>
    %cst_49 = arith.constant dense<0.000000e+00> : vector<128xf32>
    %153 = vector.multi_reduction <add>, %139, %cst_49 [0] : vector<16x128xf32> to vector<128xf32>
    %154 = vector.shape_cast %153 : vector<128xf32> to vector<1x128xf32>
    %cst_50 = arith.constant 0.000000e+00 : f32
    %155 = vector.shape_cast %2 : vector<16x1xf32> to vector<16x1xf32>
    %156 = vector.broadcast %155 : vector<16x1xf32> to vector<16x128xf32>
    %157 = vector.broadcast %cst_50 : f32 to vector<16x128xf32>
    %158 = arith.select %142, %156, %157 : vector<16x128xi1>, vector<16x128xf32>
    %cst_51 = arith.constant dense<0.000000e+00> : vector<128xf32>
    %159 = vector.multi_reduction <add>, %158, %cst_51 [0] : vector<16x128xf32> to vector<128xf32>
    %160 = vector.shape_cast %159 : vector<128xf32> to vector<1x128xf32>
    %cst_52 = arith.constant 0.00666666683 : f32
    %161 = vector.broadcast %cst_52 : f32 to vector<1x128xf32>
    %162 = arith.mulf %161, %148 : vector<1x128xf32>
    %cst_53 = arith.constant -6.742600e-01 : f32
    %163 = vector.broadcast %cst_53 : f32 to vector<1x128xf32>
    %164 = arith.subf %163, %162 : vector<1x128xf32>
    %cst_54 = arith.constant 0.893333315 : f32
    %165 = vector.broadcast %cst_54 : f32 to vector<1x128xf32>
    %166 = arith.mulf %165, %152 : vector<1x128xf32>
    %167 = arith.subf %164, %166 : vector<1x128xf32>
    %cst_55 = arith.constant 0.555555582 : f32
    %168 = vector.broadcast %cst_55 : f32 to vector<1x128xf32>
    %169 = arith.mulf %168, %154 : vector<1x128xf32>
    %170 = arith.addf %167, %169 : vector<1x128xf32>
    %171 = arith.mulf %170, %160 : vector<1x128xf32>
    %cst_56 = arith.constant dense<0.000000e+00> : vector<1xf32>
    %172 = vector.multi_reduction <add>, %171, %cst_56 [1] : vector<1x128xf32> to vector<1xf32>
    %173 = vector.shape_cast %172 : vector<1xf32> to vector<1x1xf32>
    %c0_57 = arith.constant 0 : index
    %c0_58 = arith.constant 0 : index
    %c0_59 = arith.constant 0 : index
    %174 = vector.load %arg4[%c0_57, %c0_58, %c0_59] : memref<1x1x1xf32, #tpu.memory_space<vmem>>, vector<1x1x1xf32>
    %175 = vector.shape_cast %174 : vector<1x1x1xf32> to vector<1x1xf32>
    %176 = vector.shape_cast %173 : vector<1x1xf32> to vector<1x1x1xf32>
    tpu.vector_store %arg4[%c0_57, %c0_58, %c0_59], %176 {strides = array<i32>} : memref<1x1x1xf32, #tpu.memory_space<vmem>>, vector<1x1x1xf32>,
    return
  }
  func.func @transform_0(%arg0: i32) -> (i32, i32) {
    %c0_i32 = arith.constant 0 : i32
    %c0_i32_0 = arith.constant 0 : i32
    return %c0_i32, %arg0 : i32, i32
  }
  func.func @transform_1(%arg0: i32) -> (i32, i32) {
    %c0_i32 = arith.constant 0 : i32
    %c0_i32_0 = arith.constant 0 : i32
    return %c0_i32, %arg0 : i32, i32
  }
  func.func @transform_2(%arg0: i32) -> (i32, i32) {
    %c0_i32 = arith.constant 0 : i32
    %c0_i32_0 = arith.constant 0 : i32
    %c0_i32_1 = arith.constant 0 : i32
    return %c0_i32, %c0_i32_0 : i32, i32
  }
  func.func @transform_3(%arg0: i32) -> (i32, i32, i32) {
    %c0_i32 = arith.constant 0 : i32
    %c0_i32_0 = arith.constant 0 : i32
    %c0_i32_1 = arith.constant 0 : i32
    return %arg0, %c0_i32, %c0_i32_0 : i32, i32, i32
  }
}

</mosaic_0001>

<llo_original>
// kernel: weighted_bi_tempered_logistic_loss.1
$region0: #{weighted_bi_tempered_logistic_loss.1}
  #allocation0 [shape = 'u32[]', space=smem, size = 0x4, offset = 0x4, fixed_abs, tag = 'smem constant byte address 0x4 - core index']
  #allocation1 [shape = 'u32[72,128]{1,0:T(1,128)}', space=vmem, size = 0x9000, scoped, tag = 'internal scratch']
  %s0 = inlined_call_operand.vmem [shape: f32[16,128], index: 0, kind: input, shape index: {}]
  %s1 = inlined_call_operand.vmem [shape: s32[1,128], index: 1, kind: input, shape index: {}]
  %s2 = inlined_call_operand.vmem [shape: f32[16,1], index: 2, kind: input, shape index: {}]
  %s3 = inlined_call_operand.hbm [shape: f32[1,1,1], index: 3, kind: output, shape index: {}]
  %s4 = sld [smem:[#allocation0]]
  $region22: #{weighted_bi_tempered_logistic_loss.1} parent=0
    _
  %s6 = ssub.s32 1, %s4
  %s7 = scalar_select 0, %s6, %s4
  $region1: #{weighted_bi_tempered_logistic_loss.1} parent=0
    #allocation2 [shape = 'u8[512]{0}', space=vmem, size = 0x400, scoped, tag = 'output window, operand 0, single buffered']
    #allocation3 [shape = 's32[1]{0}', space=sflag, size = 0x4, scoped, tag = 'scoped memory for weighted_bi_tempered_logistic_loss.1']
    %8 = vsyncpa [#allocation3], 0
    // Predicated region
    $region2: #{weighted_bi_tempered_logistic_loss.1} parent=1 // pred_check
      _
    $region3: #{weighted_bi_tempered_logistic_loss.1} parent=1 // pred_check_branch
      %10 = sbr.rel (0) target = $region5
    $region4: #{weighted_bi_tempered_logistic_loss.1} parent=1 // pred_region
      _
    $region5: #{weighted_bi_tempered_logistic_loss.1} parent=1 // pred_fallthru
      _
    // Predicated region
    $region6: #{weighted_bi_tempered_logistic_loss.1} parent=1 // pred_check
      _
    $region7: #{weighted_bi_tempered_logistic_loss.1} parent=1 // pred_check_branch
      %12 = sbr.rel (0) target = $region9
    $region8: #{weighted_bi_tempered_logistic_loss.1} parent=1 // pred_region
      _
    $region9: #{weighted_bi_tempered_logistic_loss.1} parent=1 // pred_fallthru
      _
    // Predicated region
    $region10: #{weighted_bi_tempered_logistic_loss.1} parent=1 // pred_check
      _
    $region11: #{weighted_bi_tempered_logistic_loss.1} parent=1 // pred_check_branch
      %14 = sbr.rel (0) target = $region13
    $region12: #{weighted_bi_tempered_logistic_loss.1} parent=1 // pred_region
      _
    $region13: #{weighted_bi_tempered_logistic_loss.1} parent=1 // pred_fallthru
      _
    %v15 = vld [vmem:[%s0] sm:$0xff]
    %v16 = vld [vmem:[%s0 + $0x8] sm:$0xff]
    %v17 = vld [vmem:[%s1] sm:$0x1]
    %v18 = vld [vmem:[%s2] sm:$0xff]
    %v19 = vld [vmem:[%s2 + $0x8] sm:$0xff]
    %v20 = vmax.f32 %v15, %v16
    %v21 = vrot.slane %v20, 4
    %v22 = vmax.f32 %v20, %v21
    %v23 = vrot.slane %v22, 2
    %v24 = vmax.f32 %v22, %v23
    %v25 = vrot.slane %v24, 1
    %v26 = vmax.f32 %v24, %v25
    %v27 = vsub.f32 %v15, %v26
    %v28 = vsub.f32 %v16, %v26
    %v29 = vmul.f32 %v27, -0.2
    %v30 = vmul.f32 %v28, -0.2
    %v31 = vadd.f32 %v29, 1.0
    %v32 = vadd.f32 %v30, 1.0
    %v33 = vmax.f32 %v31, 0.0
    %v34 = vmax.f32 %v32, 0.0
    %v35 = vrcp.pop %v33
    %v36 = vrcp.pop %v34
    %v37 = vmul.f32 %v33, %v35
    %v38 = vmul.f32 %v34, %v36
    %v39 = vsub.f32 2.0, %v37
    %v40 = vsub.f32 2.0, %v38
    %v41 = vmul.f32 %v35, %v39
    %v42 = vmul.f32 %v36, %v40
    %v43 = vmul.f32 %v41, %v41
    %v44 = vmul.f32 %v42, %v42
    %v45 = vmul.f32 %v43, %v43
    %v46 = vmul.f32 %v44, %v44
    %v47 = vmul.f32 %v45, %v41
    %v48 = vmul.f32 %v46, %v42
    %v49 = vadd.f32 %v47, %v48
    %v50 = vrot.slane %v49, 4
    %v51 = vadd.f32 %v49, %v50
    %v52 = vrot.slane %v51, 2
    %v53 = vadd.f32 %v51, %v52
    %v54 = vrot.slane %v53, 1
    %v55 = vadd.f32 %v53, %v54
    %v56 = vpow.f32 %v55, -0.2
    %v57 = vmul.f32 %v27, %v56
    %v58 = vmul.f32 %v28, %v56
    %v59 = vmul.f32 %v57, -0.2
    %v60 = vmul.f32 %v58, -0.2
    %v61 = vadd.f32 %v59, 1.0
    %v62 = vadd.f32 %v60, 1.0
    %v63 = vmax.f32 %v61, 0.0
    %v64 = vmax.f32 %v62, 0.0
    %v65 = vrcp.pop %v63
    %v66 = vrcp.pop %v64
    %v67 = vmul.f32 %v63, %v65
    %v68 = vmul.f32 %v64, %v66
    %v69 = vsub.f32 2.0, %v67
    %v70 = vsub.f32 2.0, %v68
    %v71 = vmul.f32 %v65, %v69
    %v72 = vmul.f32 %v66, %v70
    %v73 = vmul.f32 %v71, %v71
    %v74 = vmul.f32 %v72, %v72
    %v75 = vmul.f32 %v73, %v73
    %v76 = vmul.f32 %v74, %v74
    %v77 = vmul.f32 %v75, %v71
    %v78 = vmul.f32 %v76, %v72
    %v79 = vadd.f32 %v77, %v78
    %v80 = vrot.slane %v79, 4
    %v81 = vadd.f32 %v79, %v80
    %v82 = vrot.slane %v81, 2
    %v83 = vadd.f32 %v81, %v82
    %v84 = vrot.slane %v83, 1
    %v85 = vadd.f32 %v83, %v84
    %v86 = vpow.f32 %v85, -0.2
    %v87 = vmul.f32 %v27, %v86
    %v88 = vmul.f32 %v28, %v86
    %v89 = vmul.f32 %v87, -0.2
    %v90 = vmul.f32 %v88, -0.2
    %v91 = vadd.f32 %v89, 1.0
    %v92 = vadd.f32 %v90, 1.0
    %v93 = vmax.f32 %v91, 0.0
    %v94 = vmax.f32 %v92, 0.0
    %v95 = vrcp.pop %v93
    %v96 = vrcp.pop %v94
    %v97 = vmul.f32 %v93, %v95
    %v98 = vmul.f32 %v94, %v96
    %v99 = vsub.f32 2.0, %v97
    %v100 = vsub.f32 2.0, %v98
    %v101 = vmul.f32 %v95, %v99
    %v102 = vmul.f32 %v96, %v100
    %v103 = vmul.f32 %v101, %v101
    %v104 = vmul.f32 %v102, %v102
    %v105 = vmul.f32 %v103, %v103
    %v106 = vmul.f32 %v104, %v104
    %v107 = vmul.f32 %v105, %v101
    %v108 = vmul.f32 %v106, %v102
    %v109 = vadd.f32 %v107, %v108
    %v110 = vrot.slane %v109, 4
    %v111 = vadd.f32 %v109, %v110
    %v112 = vrot.slane %v111, 2
    %v113 = vadd.f32 %v111, %v112
    %v114 = vrot.slane %v113, 1
    %v115 = vadd.f32 %v113, %v114
    %v116 = vpow.f32 %v115, -0.2
    %v117 = vmul.f32 %v27, %v116
    %v118 = vmul.f32 %v28, %v116
    %v119 = vmul.f32 %v117, -0.2
    %v120 = vmul.f32 %v118, -0.2
    %v121 = vadd.f32 %v119, 1.0
    %v122 = vadd.f32 %v120, 1.0
    %v123 = vmax.f32 %v121, 0.0
    %v124 = vmax.f32 %v122, 0.0
    %v125 = vrcp.pop %v123
    %v126 = vrcp.pop %v124
    %v127 = vmul.f32 %v123, %v125
    %v128 = vmul.f32 %v124, %v126
    %v129 = vsub.f32 2.0, %v127
    %v130 = vsub.f32 2.0, %v128
    %v131 = vmul.f32 %v125, %v129
    %v132 = vmul.f32 %v126, %v130
    %v133 = vmul.f32 %v131, %v131
    %v134 = vmul.f32 %v132, %v132
    %v135 = vmul.f32 %v133, %v133
    %v136 = vmul.f32 %v134, %v134
    %v137 = vmul.f32 %v135, %v131
    %v138 = vmul.f32 %v136, %v132
    %v139 = vadd.f32 %v137, %v138
    %v140 = vrot.slane %v139, 4
    %v141 = vadd.f32 %v139, %v140
    %v142 = vrot.slane %v141, 2
    %v143 = vadd.f32 %v141, %v142
    %v144 = vrot.slane %v143, 1
    %v145 = vadd.f32 %v143, %v144
    %v146 = vpow.f32 %v145, -0.2
    %v147 = vmul.f32 %v27, %v146
    %v148 = vmul.f32 %v28, %v146
    %v149 = vmul.f32 %v147, -0.2
    %v150 = vmul.f32 %v148, -0.2
    %v151 = vadd.f32 %v149, 1.0
    %v152 = vadd.f32 %v150, 1.0
    %v153 = vmax.f32 %v151, 0.0
    %v154 = vmax.f32 %v152, 0.0
    %v155 = vrcp.pop %v153
    %v156 = vrcp.pop %v154
    %v157 = vmul.f32 %v153, %v155
    %v158 = vmul.f32 %v154, %v156
    %v159 = vsub.f32 2.0, %v157
    %v160 = vsub.f32 2.0, %v158
    %v161 = vmul.f32 %v155, %v159
    %v162 = vmul.f32 %v156, %v160
    %v163 = vmul.f32 %v161, %v161
    %v164 = vmul.f32 %v162, %v162
    %v165 = vmul.f32 %v163, %v163
    %v166 = vmul.f32 %v164, %v164
    %v167 = vmul.f32 %v165, %v161
    %v168 = vmul.f32 %v166, %v162
    %v169 = vadd.f32 %v167, %v168
    %v170 = vrot.slane %v169, 4
    %v171 = vadd.f32 %v169, %v170
    %v172 = vrot.slane %v171, 2
    %v173 = vadd.f32 %v171, %v172
    %v174 = vrot.slane %v173, 1
    %v175 = vadd.f32 %v173, %v174
    %v176 = vpow.f32 %v175, -0.2
    %v177 = vmul.f32 %v27, %v176
    %v178 = vmul.f32 %v28, %v176
    %v179 = vmul.f32 %v177, -0.2
    %v180 = vmul.f32 %v178, -0.2
    %v181 = vadd.f32 %v179, 1.0
    %v182 = vadd.f32 %v180, 1.0
    %v183 = vmax.f32 %v181, 0.0
    %v184 = vmax.f32 %v182, 0.0
    %v185 = vrcp.pop %v183
    %v186 = vrcp.pop %v184
    %v187 = vmul.f32 %v183, %v185
    %v188 = vmul.f32 %v184, %v186
    %v189 = vsub.f32 2.0, %v187
    %v190 = vsub.f32 2.0, %v188
    %v191 = vmul.f32 %v185, %v189
    %v192 = vmul.f32 %v186, %v190
    %v193 = vmul.f32 %v191, %v191
    %v194 = vmul.f32 %v192, %v192
    %v195 = vmul.f32 %v193, %v193
    %v196 = vmul.f32 %v194, %v194
    %v197 = vmul.f32 %v195, %v191
    %v198 = vmul.f32 %v196, %v192
    %v199 = vadd.f32 %v197, %v198
    %v200 = vrot.slane %v199, 4
    %v201 = vadd.f32 %v199, %v200
    %v202 = vrot.slane %v201, 2
    %v203 = vadd.f32 %v201, %v202
    %v204 = vrot.slane %v203, 1
    %v205 = vadd.f32 %v203, %v204
    %v206 = vpow.f32 %v205, 0.2
    %v207 = vadd.f32 %v206, %v29
    %v208 = vadd.f32 %v206, %v30
    %v209 = vmax.f32 %v207, 0.0
    %v210 = vmax.f32 %v208, 0.0
    %v211 = vrcp.pop %v209
    %v212 = vrcp.pop %v210
    %v213 = vmul.f32 %v209, %v211
    %v214 = vmul.f32 %v210, %v212
    %v215 = vsub.f32 2.0, %v213
    %v216 = vsub.f32 2.0, %v214
    %v217 = vmul.f32 %v211, %v215
    %v218 = vmul.f32 %v212, %v216
    %v219 = vmul.f32 %v217, %v217
    %v220 = vmul.f32 %v218, %v218
    %v221 = vmul.f32 %v219, %v219
    %v222 = vmul.f32 %v220, %v220
    %v223 = vmul.f32 %v221, %v221
    %v224 = vmul.f32 %v222, %v222
    %v225 = vmul.f32 %v223, %v217
    %v226 = vmul.f32 %v224, %v218
    %v227 = vlaneseq
    %v228 = vshrl.u32 %v227, 7
    %v229 = vadd.s32 %v228, 8
    %v230 = vperm.slane %v17, 0
    %vm231 = vcmp.eq.s32.totalorder %v228, %v230
    %vm232 = vcmp.eq.s32.totalorder %v229, %v230
    %v233 = vsub.f32 %v221, 1.0
    %v234 = vsub.f32 %v222, 1.0
    %v235 = vmul.f32 %v233, 1.25
    %v236 = vmul.f32 %v234, 1.25
    %v237 = vadd.f32 %v235, %v236
    %v238 = vrot.slane %v237, 4
    %v239 = vadd.f32 %v237, %v238
    %v240 = vrot.slane %v239, 2
    %v241 = vadd.f32 %v239, %v240
    %v242 = vrot.slane %v241, 1
    %v243 = vadd.f32 %v241, %v242
    %v244 = vsel %vm231, %v235, 0.0
    %v245 = vsel %vm232, %v236, 0.0
    %v246 = vadd.f32 %v244, %v245
    %v247 = vrot.slane %v246, 4
    %v248 = vadd.f32 %v246, %v247
    %v249 = vrot.slane %v248, 2
    %v250 = vadd.f32 %v248, %v249
    %v251 = vrot.slane %v250, 1
    %v252 = vadd.f32 %v250, %v251
    %v253 = vadd.f32 %v225, %v226
    %v254 = vrot.slane %v253, 4
    %v255 = vadd.f32 %v253, %v254
    %v256 = vrot.slane %v255, 2
    %v257 = vadd.f32 %v255, %v256
    %v258 = vrot.slane %v257, 1
    %v259 = vadd.f32 %v257, %v258
    %261 = vset.pattern.permute.xlu0 0
    %262 = vperm.xlu0 %261, %v18
    %v263 = vpop.permute.xlu0 %262
    %266 = vset.pattern.permute.xlu0 0
    %267 = vperm.xlu0 %266, %v19
    %v268 = vpop.permute.xlu0 %267
    %v270 = vsel %vm231, %v263, 0.0
    %v271 = vsel %vm232, %v268, 0.0
    %v272 = vadd.f32 %v270, %v271
    %v273 = vrot.slane %v272, 4
    %v274 = vadd.f32 %v272, %v273
    %v275 = vrot.slane %v274, 2
    %v276 = vadd.f32 %v274, %v275
    %v277 = vrot.slane %v276, 1
    %v278 = vadd.f32 %v276, %v277
    %v279 = vmul.f32 %v243, 0.006666667
    %v280 = vsub.f32 -0.67426, %v279
    %v281 = vmul.f32 %v252, 0.8933333
    %v282 = vsub.f32 %v280, %v281
    %v283 = vmul.f32 %v259, 0.5555556
    %v284 = vadd.f32 %v282, %v283
    %v285 = vmul.f32 %v284, %v278
    %286 = vadd.xlane.f32.xlu0 %v285
    %v287 = vpop.xlane.xlu0 %286
    %vm288 = vcmask 0
    %289 = vst.msk [vmem:[#allocation2] sm:$0x1] %vm288, %v287
    // Predicated region
    $region14: #{weighted_bi_tempered_logistic_loss.1} parent=1 // pred_check
      _
    $region15: #{weighted_bi_tempered_logistic_loss.1} parent=1 // pred_check_branch
      %291 = sbr.rel (0) target = $region17
    $region16: #{weighted_bi_tempered_logistic_loss.1} parent=1 // pred_region
      %293 = vsyncadd [#allocation3], 0
      %s295 = sshll.u32 [#allocation2], 4
      %s296 = int_to_ptr.vmem [resolvable:$true] %s295
      %s297 = sshll.u32 %s3, 4
      %s298 = int_to_ptr.hbm [resolvable:$true] %s297
      %300 = dma.vmem_to_hbm [thread:$0]  %s296, 16, %s298, [#allocation3]
    $region17: #{weighted_bi_tempered_logistic_loss.1} parent=1 // pred_fallthru
      _
    // Predicated region
    $region18: #{weighted_bi_tempered_logistic_loss.1} parent=1 // pred_check
      _
    $region19: #{weighted_bi_tempered_logistic_loss.1} parent=1 // pred_check_branch
      %302 = sbr.rel (0) target = $region21
    $region20: #{weighted_bi_tempered_logistic_loss.1} parent=1 // pred_region
      %304 = dma.done [#allocation3], 16
    $region21: #{weighted_bi_tempered_logistic_loss.1} parent=1 // pred_fallthru
      _
    %305 = vsyncpa [#allocation3], 1

</llo_original>
